<compile_context>
chip_gen: v6e
topology: v6e:2x2x1
jax: 0.10.0
libtpu: 0.0.40
codegen_flags: <defaults>
</compile_context>

<pallas_src>
import functools

import jax
import jax.numpy as jnp
import numpy as np
from jax.experimental import pallas as pl
from jax.experimental.pallas import tpu as pltpu

_UNROLL_LIMIT = 16  # full Python unroll up to this sequence length, fori_loop beyond.


# -----------------------------------------------------------------------------
# One-time probe of the pltpu.roll rotate convention (np.roll-like or reversed).
# The gate alignment below relies on static lane rotations; resolving the sign at
# init time makes the kernel robust to either convention at zero per-call cost.
# -----------------------------------------------------------------------------
@functools.lru_cache(maxsize=1)
def _roll_matches_numpy():
    def probe(x_ref, o_ref):
        o_ref[...] = pltpu.roll(x_ref[...], 1, axis=1)

    x = jax.lax.broadcasted_iota(jnp.float32, (8, 128), 1)
    y = pl.pallas_call(
        probe, out_shape=jax.ShapeDtypeStruct((8, 128), jnp.float32))(x)
    y = np.asarray(jax.block_until_ready(y))
    xn = np.asarray(x)
    if np.array_equal(y, np.roll(xn, 1, axis=1)):
        return True
    if np.array_equal(y, np.roll(xn, -1, axis=1)):
        return False
    raise RuntimeError("unexpected pltpu.roll semantics")


def _make_gru_kernel(seq_len, sw, lanes, roll_fwd):
    """Builds the GRU kernel for a fixed sequence length / packing geometry.

    Packed lane layout (slot width sw == hidden size H, lanes == 4*sw padded up to a
    multiple of 128):
        slot0 [0   , sw )  : r-gate preactivation
        slot1 [sw  , 2sw)  : z-gate preactivation
        slot2 [2sw , 3sw)  : n-gate preactivation
        slot3 [3sw , 4sw)  : hidden state h
    """

    def lane_roll(x, delta):
        # Desired semantics: element at lane i moves to lane (i + delta) % lanes.
        amt = (delta if roll_fwd else -delta) % lanes
        if amt == 0:
            return x
        return pltpu.roll(x, amt, axis=1)

    final_shift = lanes - 3 * sw  # rotate the h slot back to lanes [0, H)

    def kernel(x_ref, wih_ref, whh_ref, bgi_ref, bhn_ref, h_out_ref, gi_ref):
        # Loop-invariant single (lanes, lanes) bf16 weight tile, loaded once.
        # TODO(synk): if the bundle dump shows per-step RHS re-latches, drive the MXU
        # explicitly (pltpu.matmul_push_rhs / matmul_acc_lhs / matmul_pop) to hold it.
        w_hh = whh_ref[...]
        b_hn = bhn_ref[...]

        # Hoisted input projection: one f32 MXU pass over the whole sequence, with the
        # r/z biases (input+hidden) and the n input bias folded in.  Staged once into a
        # VMEM scratch so per-step rows are 1-sublane loads off the serial h-chain.
        gi_all = jnp.dot(x_ref[...], wih_ref[...],
                         preferred_element_type=jnp.float32) + bgi_ref[...]
        gi_ref[0:seq_len, :] = gi_all

        def step(gi, h):
            # gi: (1, lanes) f32; h: (8, lanes) f32 (rows identical, whole-vreg slabs).
            gh = jnp.dot(h.astype(jnp.bfloat16), w_hh,
                         preferred_element_type=jnp.float32)  # r|z|n preacts @ slots 0|1|2
            a = jax.nn.sigmoid(gi + gh)                       # r@slot0, z@slot1
            a_sh = lane_roll(a, 2 * sw)                       # r -> slot2, z -> slot3 (XLU)
            n = jnp.tanh(gi + a_sh * (gh + b_hn))             # n@slot2
            n_sh = lane_roll(n, sw)                           # n -> slot3 (XLU)
            return n_sh + a_sh * (h - n_sh)                   # h' = n + z*(h-n) @ slot3

        # Hidden state replicated over 8 sublanes: every per-step value is a canonical
        # (8, lanes) vreg slab at the same per-vreg cost as a single-row state.
        h = jnp.zeros((8, lanes), jnp.float32)
        if seq_len <= _UNROLL_LIMIT:
            # Small static T: full unroll with static scratch-row slices.
            for t in range(seq_len):
                h = step(gi_ref[t:t + 1, :], h)
        else:
            # Long sequences: bounded live ranges via fori_loop + dynamic row loads.
            def body(t, carry):
                return step(gi_ref[pl.ds(t, 1), :], carry)

            h = jax.lax.fori_loop(0, seq_len, body, h, unroll=2)

        # Rotate the h slot back to lanes [0, H); lanes beyond H are scratch values.
        h_out_ref[...] = lane_roll(h, final_shift)

    return kernel


def prepare_gru_params(w_ih, w_hh, b_ih, b_hh):
    """One-time weight preparation (model-load time, NOT per forward call).

    PyTorch layout: w_ih (3H, D), w_hh (3H, H), biases (3H,), gate order r, z, n.
    Packs gates + hidden state into four H-wide lane slots [ r | z | n | h ] so the
    recurrent weight is a single (lanes, lanes) MXU tile.
    """
    three_h, d = w_ih.shape
    hid = three_h // 3
    sw = hid
    lanes = max(128, ((4 * sw + 127) // 128) * 128)

    w_ih = np.asarray(w_ih, np.float32)
    w_hh = np.asarray(w_hh, np.float32)
    b_ih = np.asarray(b_ih, np.float32)
    b_hh = np.asarray(b_hh, np.float32)

    wih_p = np.zeros((d, lanes), np.float32)      # x -> gate slots 0..2
    whh_p = np.zeros((lanes, lanes), np.float32)  # h slot (rows 3sw..) -> gate slots (cols)
    b_gi = np.zeros((1, lanes), np.float32)       # folded biases for the input projection
    b_hn = np.zeros((1, lanes), np.float32)       # hidden bias of the n gate only

    for g in range(3):  # g = 0:r, 1:z, 2:n
        wih_p[:, g * sw:g * sw + hid] = w_ih[g * hid:(g + 1) * hid, :].T
        whh_p[3 * sw:3 * sw + hid, g * sw:g * sw + hid] = w_hh[g * hid:(g + 1) * hid, :].T
    b_gi[0, 0:hid] = b_ih[0:hid] + b_hh[0:hid]                     # r: both biases
    b_gi[0, sw:sw + hid] = b_ih[hid:2 * hid] + b_hh[hid:2 * hid]   # z: both biases
    b_gi[0, 2 * sw:2 * sw + hid] = b_ih[2 * hid:3 * hid]           # n: input bias only
    b_hn[0, 2 * sw:2 * sw + hid] = b_hh[2 * hid:3 * hid]           # n: hidden bias

    return {
        "wih": jnp.asarray(wih_p, jnp.float32),    # f32: one-time input projection
        "whh": jnp.asarray(whh_p, jnp.bfloat16),   # bf16: per-step MXU operand
        "b_gi": jnp.asarray(b_gi),
        "b_hn": jnp.asarray(b_hn),
        "hidden": hid,
        "sw": sw,
        "lanes": lanes,
        "roll_fwd": _roll_matches_numpy(),
    }


def gru_forward(inputs, params):
    """Mirrors RNN.forward: inputs (item_num, e_dim) [or (1, item_num, e_dim)]
    -> final hidden state h of shape (1, 1, hidden)."""
    if inputs.ndim == 3:
        assert inputs.shape[0] == 1, "kernel implements the batch=1 path of RNN.forward"
        seq = inputs[0]
    else:
        seq = inputs  # (T, D), implicit batch = 1

    seq_len = seq.shape[0]
    sw, lanes, hid = params["sw"], params["lanes"], params["hidden"]
    t_pad = max(8, ((seq_len + 7) // 8) * 8)

    kernel = _make_gru_kernel(seq_len, sw, lanes, params["roll_fwd"])
    vmem = pl.BlockSpec(memory_space=pltpu.MemorySpace.VMEM)

    h_final = pl.pallas_call(
        kernel,
        out_shape=jax.ShapeDtypeStruct((8, lanes), jnp.float32),
        in_specs=[vmem] * 5,
        out_specs=vmem,
        scratch_shapes=[pltpu.VMEM((t_pad, lanes), jnp.float32)],
    )(seq.astype(jnp.float32), params["wih"], params["whh"],
      params["b_gi"], params["b_hn"])

    # PyTorch GRU returns h with shape (num_layers, batch, hidden) = (1, 1, H).
    return h_final[0:1, :hid].reshape(1, 1, hid)


def gru_reference(seq, w_ih, w_hh, b_ih, b_hh):
    """Pure-JAX f32 reference of the PyTorch GRU recurrence (gate order r, z, n)."""
    T, _ = seq.shape
    H = w_hh.shape[0] // 3
    h = jnp.zeros((1, H), jnp.float32)
    for t in range(T):
        x_t = seq[t:t + 1].astype(jnp.float32)
        gi = x_t @ w_ih.T + b_ih
        gh = h @ w_hh.T + b_hh
        r = jax.nn.sigmoid(gi[:, 0:H] + gh[:, 0:H])
        z = jax.nn.sigmoid(gi[:, H:2 * H] + gh[:, H:2 * H])
        n = jnp.tanh(gi[:, 2 * H:3 * H] + r * gh[:, 2 * H:3 * H])
        h = (1.0 - z) * n + z * h
    return h.reshape(1, 1, H)


if __name__ == "__main__":
    in_feat = 32   # e_dim == hidden (module uses hid == in_feat)
    item_num = 8   # sequence length

    key = jax.random.PRNGKey(0)
    k_x, k_wih, k_whh, k_bih, k_bhh = jax.random.split(key, 5)

    # PyTorch GRU.reset_parameters: U(-1/sqrt(H), 1/sqrt(H)) for all params.
    bound = 1.0 / np.sqrt(in_feat)
    inputs = jax.random.normal(k_x, (item_num, in_feat), jnp.float32)
    w_ih = jax.random.uniform(k_wih, (3 * in_feat, in_feat), jnp.float32, -bound, bound)
    w_hh = jax.random.uniform(k_whh, (3 * in_feat, in_feat), jnp.float32, -bound, bound)
    b_ih = jax.random.uniform(k_bih, (3 * in_feat,), jnp.float32, -bound, bound)
    b_hh = jax.random.uniform(k_bhh, (3 * in_feat,), jnp.float32, -bound, bound)

    # One-time weight prep (outside the per-call path).
    params = prepare_gru_params(w_ih, w_hh, b_ih, b_hh)

    h = gru_forward(inputs, params)
    h = jax.block_until_ready(h)

    h_ref = gru_reference(inputs, w_ih, w_hh, b_ih, b_hh)
    # Only the recurrent matmul uses bf16 operands (f32 accumulate / f32 gate math);
    # expected drift at T=8 is a few 1e-3, so 1e-2 keeps margin while still catching
    # structural bugs (layout/roll errors would be O(1)).
    np.testing.assert_allclose(np.asarray(h), np.asarray(h_ref), rtol=1e-2, atol=1e-2)
    assert h.shape == (1, 1, in_feat)

    print("KERNEL_OK")
</pallas_src>

<mosaic_0001>
module attributes {stable_mosaic.version = 11 : i64} {
  func.func @probe(%arg0: memref<8x128xf32, #tpu.memory_space<vmem>>, %arg1: memref<8x128xf32, #tpu.memory_space<vmem>>) attributes {dimension_semantics = [], scalar_prefetch = 0 : i64, scratch_operands = 0 : i64, tpu.core_type = #tpu.core_type<tc>} {
    %c0 = arith.constant 0 : index
    %c0_0 = arith.constant 0 : index
    %0 = vector.load %arg0[%c0, %c0_0] : memref<8x128xf32, #tpu.memory_space<vmem>>, vector<8x128xf32>
    %c1_i32 = arith.constant 1 : i32
    %1 = tpu.dynamic_rotate %0 by %c1_i32 dim 1 : vector<8x128xf32>, i32 -> vector<8x128xf32>
    %c0_1 = arith.constant 0 : index
    %c0_2 = arith.constant 0 : index
    %2 = vector.load %arg1[%c0_1, %c0_2] : memref<8x128xf32, #tpu.memory_space<vmem>>, vector<8x128xf32>
    tpu.vector_store %arg1[%c0_1, %c0_2], %1 {strides = array<i32>} : memref<8x128xf32, #tpu.memory_space<vmem>>, vector<8x128xf32>,
    return
  }
}

</mosaic_0001>

<llo_original>
// kernel: tpu_custom_call.1
$region0: #{tpu_custom_call.1}
  #allocation0 [shape = 'u32[]', space=smem, size = 0x4, offset = 0x4, fixed_abs, tag = 'smem constant byte address 0x4 - core index']
  #allocation1 [shape = 'u32[144,128]{1,0:T(1,128)}', space=vmem, size = 0x12000, scoped, tag = 'internal scratch']
  %s0 = inlined_call_operand.hbm [shape: f32[8,128], index: 0, kind: input, shape index: {}]
  %s1 = inlined_call_operand.hbm [shape: f32[8,128], index: 1, kind: output, shape index: {}]
  %s2 = sld [smem:[#allocation0]]
  $region18: #{tpu_custom_call.1} parent=0
    _
  %s4 = ssub.s32 1, %s2
  %s5 = scalar_select 0, %s4, %s2
  $region1: #{tpu_custom_call.1} parent=0
    #allocation2 [shape = 'u8[4096]{0}', space=vmem, size = 0x1000, scoped, tag = 'input window, operand 0, single buffered']
    #allocation3 [shape = 's32[1]{0}', space=sflag, size = 0x4, scoped, tag = 'scoped memory for tpu_custom_call.1']
    #allocation4 [shape = 's32[1]{0}', space=sflag, size = 0x4, scoped, tag = 'scoped memory for tpu_custom_call.1']
    #allocation5 [shape = 'u8[4096]{0}', space=vmem, size = 0x1000, scoped, tag = 'output window, operand 0, single buffered']
    %6 = vsyncpa [#allocation3], 0
    %7 = vsyncpa [#allocation4], 0
    // Predicated region
    $region2: #{tpu_custom_call.1} parent=1 // pred_check
      _
    $region3: #{tpu_custom_call.1} parent=1 // pred_check_branch
      %9 = sbr.rel (0) target = $region5
    $region4: #{tpu_custom_call.1} parent=1 // pred_region
      %s11 = ssub.s32 128, 128
      %12 = vsyncadd [#allocation3], %s11
      %s14 = sshll.u32 [#allocation2], 4
      %s15 = int_to_ptr.vmem [resolvable:$true] %s14
      %17 = dma.hbm_to_vmem [thread:$0]  %s0, 128, %s15, [#allocation3]
    $region5: #{tpu_custom_call.1} parent=1 // pred_fallthru
      _
    // Predicated region
    $region6: #{tpu_custom_call.1} parent=1 // pred_check
      _
    $region7: #{tpu_custom_call.1} parent=1 // pred_check_branch
      %19 = sbr.rel (0) target = $region9
    $region8: #{tpu_custom_call.1} parent=1 // pred_region
      %20 = dma.done [#allocation3], 128
    $region9: #{tpu_custom_call.1} parent=1 // pred_fallthru
      _
    %v21 = vld [vmem:[#allocation2] sm:$0xff]
    %22 = vrot.lane.b32.xlu0 %v21, 1
    %v23 = vpop.permute.xlu0 %22
    %24 = vst [vmem:[#allocation5] sm:$0xff] %v23
    // Predicated region
    $region10: #{tpu_custom_call.1} parent=1 // pred_check
      _
    $region11: #{tpu_custom_call.1} parent=1 // pred_check_branch
      %26 = sbr.rel (0) target = $region13
    $region12: #{tpu_custom_call.1} parent=1 // pred_region
      %s28 = ssub.s32 128, 128
      %29 = vsyncadd [#allocation4], %s28
      %s31 = sshll.u32 [#allocation5], 4
      %s32 = int_to_ptr.vmem [resolvable:$true] %s31
      %34 = dma.vmem_to_hbm [thread:$0]  %s32, 128, %s1, [#allocation4]
    $region13: #{tpu_custom_call.1} parent=1 // pred_fallthru
      _
    // Predicated region
    $region14: #{tpu_custom_call.1} parent=1 // pred_check
      _
    $region15: #{tpu_custom_call.1} parent=1 // pred_check_branch
      %36 = sbr.rel (0) target = $region17
    $region16: #{tpu_custom_call.1} parent=1 // pred_region
      %37 = dma.done [#allocation4], 128
    $region17: #{tpu_custom_call.1} parent=1 // pred_fallthru
      _
    %38 = vsyncpa [#allocation3], 1
    %39 = vsyncpa [#allocation4], 1

</llo_original>
